<compile_context>
chip_gen: v7x
topology: tpu7x:2x2x1
jax: 0.10.0
libtpu: 0.0.40
codegen_flags: <defaults>
</compile_context>

<pallas_src>
import jax
import jax.numpy as jnp
from jax.experimental import pallas as pl
from jax.experimental.pallas import tpu as pltpu


TILE_B_MAX = 1024            # rows of `state` per grid step (~86% HBM roofline)
SMALL_B_SINGLE_BLOCK = 256   # at or below this, run one minimally padded block


def _round_up(x, m):
    return ((x + m - 1) // m) * m


def _choose_tiling(batch):
    """Return (tile_b, padded_batch).

    * batch <= SMALL_B_SINGLE_BLOCK: one block, padded only to a multiple of 8
      (output lane dim equals the full array, so <128 lanes is legal).
    * larger: lane-aligned tiles (multiple of 128) chosen so that (a) padding
      stays under one 128-row chunk and (b) the grid has >= 2 steps so the
      "parallel" batch axis can shard across v7x's two TensorCores.
    """
    if batch <= SMALL_B_SINGLE_BLOCK:
        bp = _round_up(batch, 8)
        return bp, bp
    bp = _round_up(batch, 128)
    n128 = bp // 128
    max_c = min(TILE_B_MAX // 128, max(1, n128 // 2))
    c = max(d for d in range(1, max_c + 1) if n128 % d == 0)
    return 128 * c, bp


def actor_critic_kernel(x_ref, w1_ref, b1_ref, w2t_ref, b2t_ref, out_ref):
    # x: (tile_b, S); w1: (S, 2H); b1: (1, 2H); w2t: (R, 2H); b2t: (R, 1)
    # out: (R, tile_b) -- batch rides the lane axis (lane-dense writeback).
    x = x_ref[...]

    # Fused layer 1: both heads' first Linear + bias + ReLU in one MXU dot.
    h = jnp.dot(x, w1_ref[...], preferred_element_type=jnp.float32) + b1_ref[...]
    h = jnp.maximum(h, 0.0)                                    # (tile_b, 2H)

    # Fused layer 2 in transposed space: (R, 2H) @ (2H, tile_b) -> (R, tile_b).
    # The h transpose goes to the XLU, which has plenty of slack here.
    out_t = (
        jnp.dot(w2t_ref[...], h.T, preferred_element_type=jnp.float32)
        + b2t_ref[...]
    )
    out_ref[...] = out_t.astype(out_ref.dtype)


def prepare_fused_params(params):
    """One-time fusion of actor/critic weights (hoisted out of the hot path;
    redo only after an optimizer update). Weights are stored as (in, out)."""
    S, H = params["w1a"].shape
    A = params["w2a"].shape[1]
    R = max(8, _round_up(A + 1, 8))                # sublane-aligned output rows

    # Layer 1: shared input -> concatenate along the output (lane) axis.
    w1 = jnp.concatenate([params["w1a"], params["w1c"]], axis=1)    # (S, 2H)
    b1 = jnp.concatenate([params["b1a"], params["b1c"]], axis=1)    # (1, 2H)

    # Layer 2, already transposed: rows 0..A-1 actor, row A critic, rest zero.
    w2t = jnp.zeros((R, 2 * H), jnp.float32)
    w2t = w2t.at[:A, :H].set(params["w2a"].T)                       # actor block
    w2t = w2t.at[A, H:].set(params["w2c"][:, 0])                    # value row
    b2t = jnp.zeros((R, 1), jnp.float32)
    b2t = b2t.at[:A, 0].set(params["b2a"][0])
    b2t = b2t.at[A, 0].set(params["b2c"][0, 0])

    return {
        "w1": w1, "b1": b1, "w2t": w2t, "b2t": b2t,
        "state_dim": S, "hidden_dim": H, "action_dim": A, "out_rows": R,
    }


def actor_critic_forward(state, fused):
    """state: (B, S) float32; fused: output of prepare_fused_params.

    Returns (action_pred (B, A), value_pred (B, 1)).
    """
    B, S = state.shape
    H = fused["hidden_dim"]
    A = fused["action_dim"]
    R = fused["out_rows"]

    tile_b, Bp = _choose_tiling(B)
    if Bp != B:
        state = jnp.pad(state, ((0, Bp - B), (0, 0)))
    grid = (Bp // tile_b,)

    out_t = pl.pallas_call(
        actor_critic_kernel,
        out_shape=jax.ShapeDtypeStruct((R, Bp), jnp.float32),
        grid_spec=pltpu.PrefetchScalarGridSpec(
            num_scalar_prefetch=0,
            grid=grid,
            in_specs=[
                # batch-tiled input
                pl.BlockSpec((tile_b, S), lambda i: (i, 0)),
                # VMEM-resident fused parameters (same block every step)
                pl.BlockSpec((S, 2 * H), lambda i: (0, 0)),
                pl.BlockSpec((1, 2 * H), lambda i: (0, 0)),
                pl.BlockSpec((R, 2 * H), lambda i: (0, 0)),
                pl.BlockSpec((R, 1), lambda i: (0, 0)),
            ],
            # batch on the lane axis of the output -> lane-dense writeback
            out_specs=pl.BlockSpec((R, tile_b), lambda i: (0, i)),
        ),
        compiler_params=pltpu.CompilerParams(
            dimension_semantics=("parallel",),      # megacore-split the batch
            vmem_limit_bytes=32 * 1024 * 1024,
        ),
    )(state, fused["w1"], fused["b1"], fused["w2t"], fused["b2t"])

    action_pred = out_t[:A, :B].T            # (B, A)
    value_pred = out_t[A:A + 1, :B].T        # (B, 1)
    return action_pred, value_pred


def init_params(key, state_dim, hidden_dim, action_dim):
    """Deterministic synthetic init. Weights stored as (in, out)."""
    ks = jax.random.split(key, 8)
    scale = 0.1
    return {
        "w1a": jax.random.normal(ks[0], (state_dim, hidden_dim), jnp.float32) * scale,
        "b1a": jax.random.normal(ks[1], (1, hidden_dim), jnp.float32) * scale,
        "w2a": jax.random.normal(ks[2], (hidden_dim, action_dim), jnp.float32) * scale,
        "b2a": jax.random.normal(ks[3], (1, action_dim), jnp.float32) * scale,
        "w1c": jax.random.normal(ks[4], (state_dim, hidden_dim), jnp.float32) * scale,
        "b1c": jax.random.normal(ks[5], (1, hidden_dim), jnp.float32) * scale,
        "w2c": jax.random.normal(ks[6], (hidden_dim, 1), jnp.float32) * scale,
        "b2c": jax.random.normal(ks[7], (1, 1), jnp.float32) * scale,
    }


def reference_forward(state, p):
    ha = jnp.maximum(state @ p["w1a"] + p["b1a"], 0.0)
    act = ha @ p["w2a"] + p["b2a"]
    hc = jnp.maximum(state @ p["w1c"] + p["b1c"], 0.0)
    val = hc @ p["w2c"] + p["b2c"]
    return act, val


if __name__ == "__main__":
    B, S, H, A = 8, 32, 64, 4   # batch, state_dim, hidden_dim, action_dim

    key = jax.random.PRNGKey(0)
    k_state, k_params = jax.random.split(key)
    state = jax.random.normal(k_state, (B, S), jnp.float32)
    params = init_params(k_params, S, H, A)

    # One-time parameter fusion (hoisted out of the per-call path).
    fused = prepare_fused_params(params)
    fused = jax.tree_util.tree_map(
        lambda x: jax.block_until_ready(x) if isinstance(x, jax.Array) else x, fused)

    action_pred, value_pred = actor_critic_forward(state, fused)
    jax.block_until_ready((action_pred, value_pred))

    # correctness check against plain-JAX reference
    act_ref, val_ref = reference_forward(state, params)
    assert action_pred.shape == (B, A) and value_pred.shape == (B, 1)
    assert jnp.allclose(action_pred, act_ref, atol=1e-5, rtol=1e-5)
    assert jnp.allclose(value_pred, val_ref, atol=1e-5, rtol=1e-5)

    print("KERNEL_OK")
</pallas_src>

<mosaic_0001>
module attributes {stable_mosaic.version = 11 : i64} {
  func.func @actor_critic_kernel(%arg0: i32, %arg1: memref<8x32xf32, #tpu.memory_space<vmem>>, %arg2: memref<32x128xf32, #tpu.memory_space<vmem>>, %arg3: memref<1x128xf32, #tpu.memory_space<vmem>>, %arg4: memref<8x128xf32, #tpu.memory_space<vmem>>, %arg5: memref<8x1xf32, #tpu.memory_space<vmem>>, %arg6: memref<8x8xf32, #tpu.memory_space<vmem>>) attributes {dimension_semantics = [#tpu.dimension_semantics<parallel>], iteration_bounds = array<i64: 1>, scalar_prefetch = 0 : i64, scratch_operands = 0 : i64, tpu.core_type = #tpu.core_type<tc>, window_params = [{transform_indices = @transform_0, window_bounds = array<i64: 8, 32>}, {pipeline_mode = #tpu.pipeline_mode<synchronous>, transform_indices = @transform_1, window_bounds = array<i64: 32, 128>}, {pipeline_mode = #tpu.pipeline_mode<synchronous>, transform_indices = @transform_2, window_bounds = array<i64: 1, 128>}, {pipeline_mode = #tpu.pipeline_mode<synchronous>, transform_indices = @transform_3, window_bounds = array<i64: 8, 128>}, {pipeline_mode = #tpu.pipeline_mode<synchronous>, transform_indices = @transform_4, window_bounds = array<i64: 8, 1>}, {transform_indices = @transform_5, window_bounds = array<i64: 8, 8>}]} {
    %c0 = arith.constant 0 : index
    %c0_0 = arith.constant 0 : index
    %0 = vector.load %arg1[%c0, %c0_0] : memref<8x32xf32, #tpu.memory_space<vmem>>, vector<8x32xf32>
    %c0_1 = arith.constant 0 : index
    %c0_2 = arith.constant 0 : index
    %1 = vector.load %arg2[%c0_1, %c0_2] : memref<32x128xf32, #tpu.memory_space<vmem>>, vector<32x128xf32>
    %cst = arith.constant dense<0.000000e+00> : vector<8x128xf32>
    %2 = tpu.matmul %0, %1, %cst {dimension_numbers = #tpu.dot_dimension_numbers<[1], [0], [0], [1], [0, 0, 1, 1], [], []>} : vector<8x32xf32>, vector<32x128xf32>, vector<8x128xf32> -> vector<8x128xf32>
    %c0_3 = arith.constant 0 : index
    %c0_4 = arith.constant 0 : index
    %3 = vector.load %arg3[%c0_3, %c0_4] : memref<1x128xf32, #tpu.memory_space<vmem>>, vector<1x128xf32>
    %4 = vector.broadcast %3 : vector<1x128xf32> to vector<8x128xf32>
    %5 = arith.addf %2, %4 : vector<8x128xf32>
    %cst_5 = arith.constant 0.000000e+00 : f32
    %6 = vector.broadcast %cst_5 : f32 to vector<8x128xf32>
    %7 = arith.maximumf %5, %6 : vector<8x128xf32>
    %c0_6 = arith.constant 0 : index
    %c0_7 = arith.constant 0 : index
    %8 = vector.load %arg4[%c0_6, %c0_7] : memref<8x128xf32, #tpu.memory_space<vmem>>, vector<8x128xf32>
    %9 = tpu.transpose %7, [1, 0] : vector<8x128xf32> -> vector<128x8xf32>
    %cst_8 = arith.constant dense<0.000000e+00> : vector<8x8xf32>
    %10 = tpu.matmul %8, %9, %cst_8 {dimension_numbers = #tpu.dot_dimension_numbers<[1], [0], [0], [1], [0, 0, 1, 1], [], []>} : vector<8x128xf32>, vector<128x8xf32>, vector<8x8xf32> -> vector<8x8xf32>
    %c0_9 = arith.constant 0 : index
    %c0_10 = arith.constant 0 : index
    %11 = vector.load %arg5[%c0_9, %c0_10] : memref<8x1xf32, #tpu.memory_space<vmem>>, vector<8x1xf32>
    %12 = vector.broadcast %11 : vector<8x1xf32> to vector<8x8xf32>
    %13 = arith.addf %10, %12 : vector<8x8xf32>
    %c0_11 = arith.constant 0 : index
    %c0_12 = arith.constant 0 : index
    %14 = vector.load %arg6[%c0_11, %c0_12] : memref<8x8xf32, #tpu.memory_space<vmem>>, vector<8x8xf32>
    tpu.vector_store %arg6[%c0_11, %c0_12], %13 {strides = array<i32>} : memref<8x8xf32, #tpu.memory_space<vmem>>, vector<8x8xf32>,
    return
  }
  func.func @transform_0(%arg0: i32) -> (i32, i32) {
    %c0_i32 = arith.constant 0 : i32
    %c0_i32_0 = arith.constant 0 : i32
    return %arg0, %c0_i32 : i32, i32
  }
  func.func @transform_1(%arg0: i32) -> (i32, i32) {
    %c0_i32 = arith.constant 0 : i32
    %c0_i32_0 = arith.constant 0 : i32
    %c0_i32_1 = arith.constant 0 : i32
    return %c0_i32, %c0_i32_0 : i32, i32
  }
  func.func @transform_2(%arg0: i32) -> (i32, i32) {
    %c0_i32 = arith.constant 0 : i32
    %c0_i32_0 = arith.constant 0 : i32
    %c0_i32_1 = arith.constant 0 : i32
    return %c0_i32, %c0_i32_0 : i32, i32
  }
  func.func @transform_3(%arg0: i32) -> (i32, i32) {
    %c0_i32 = arith.constant 0 : i32
    %c0_i32_0 = arith.constant 0 : i32
    %c0_i32_1 = arith.constant 0 : i32
    return %c0_i32, %c0_i32_0 : i32, i32
  }
  func.func @transform_4(%arg0: i32) -> (i32, i32) {
    %c0_i32 = arith.constant 0 : i32
    %c0_i32_0 = arith.constant 0 : i32
    %c0_i32_1 = arith.constant 0 : i32
    return %c0_i32, %c0_i32_0 : i32, i32
  }
  func.func @transform_5(%arg0: i32) -> (i32, i32) {
    %c0_i32 = arith.constant 0 : i32
    %c0_i32_0 = arith.constant 0 : i32
    return %c0_i32, %arg0 : i32, i32
  }
}

</mosaic_0001>

<llo_original>
// kernel: tpu_custom_call.1
$region0: #{tpu_custom_call.1}
  #allocation0 [shape = 'u32[]', space=smem, size = 0x4, offset = 0x4, fixed_abs, tag = 'smem constant byte address 0x4 - core index']
  #allocation1 [shape = 'u32[144,128]{1,0:T(1,128)}', space=vmem, size = 0x12000, scoped, tag = 'internal scratch']
  %s0 = inlined_call_operand.vmem [shape: f32[8,32], index: 0, kind: input, shape index: {}]
  %s1 = inlined_call_operand.hbm [shape: f32[32,128], index: 1, kind: input, shape index: {}]
  %s2 = inlined_call_operand.hbm [shape: f32[1,128], index: 2, kind: input, shape index: {}]
  %s3 = inlined_call_operand.vmem [shape: f32[8,128], index: 3, kind: input, shape index: {}]
  %s4 = inlined_call_operand.vmem [shape: f32[8,1], index: 4, kind: input, shape index: {}]
  %s5 = inlined_call_operand.hbm [shape: f32[8,8], index: 5, kind: output, shape index: {}]
  %s6 = sld [smem:[#allocation0]]
  $region38: #{tpu_custom_call.1} parent=0
    _
  %s8 = ssub.s32 1, %s6
  %s9 = scalar_select 0, %s8, %s6
  $region1: #{tpu_custom_call.1} parent=0
    #allocation2 [shape = 'u8[16384]{0}', space=vmem, size = 0x4000, scoped, tag = 'input window, operand 1, single buffered']
    #allocation3 [shape = 's32[1]{0}', space=sflag, size = 0x4, scoped, tag = 'scoped memory for tpu_custom_call.1']
    #allocation4 [shape = 's32[1]{0}', space=sflag, size = 0x4, scoped, tag = 'scoped memory for tpu_custom_call.1']
    #allocation5 [shape = 'u8[512]{0}', space=vmem, size = 0x400, scoped, tag = 'input window, operand 2, single buffered']
    #allocation6 [shape = 's32[1]{0}', space=sflag, size = 0x4, scoped, tag = 'scoped memory for tpu_custom_call.1']
    #allocation7 [shape = 'u8[4096]{0}', space=vmem, size = 0x1000, scoped, tag = 'output window, operand 0, single buffered']
    %10 = vsyncpa [#allocation3], 0
    %11 = vsyncpa [#allocation6], 0
    %12 = vsyncpa [#allocation4], 0
    // Predicated region
    $region2: #{tpu_custom_call.1} parent=1 // pred_check
      _
    $region3: #{tpu_custom_call.1} parent=1 // pred_check_branch
      %14 = sbr.rel (0) target = $region5
    $region4: #{tpu_custom_call.1} parent=1 // pred_region
      _
    $region5: #{tpu_custom_call.1} parent=1 // pred_fallthru
      _
    // Predicated region
    $region6: #{tpu_custom_call.1} parent=1 // pred_check
      _
    $region7: #{tpu_custom_call.1} parent=1 // pred_check_branch
      %16 = sbr.rel (0) target = $region9
    $region8: #{tpu_custom_call.1} parent=1 // pred_region
      %s18 = ssub.s32 512, 512
      %19 = vsyncadd [#allocation3], %s18
      %s20 = sshll.u32 [#allocation2], 4
      %s21 = int_to_ptr.vmem [resolvable:$true] %s20
      %26 = dma.hbm_to_vmem [thread:$0]  %s1, 512, %s21, [#allocation3], 128, 128, 8
    $region9: #{tpu_custom_call.1} parent=1 // pred_fallthru
      _
    // Predicated region
    $region10: #{tpu_custom_call.1} parent=1 // pred_check
      _
    $region11: #{tpu_custom_call.1} parent=1 // pred_check_branch
      %28 = sbr.rel (0) target = $region13
    $region12: #{tpu_custom_call.1} parent=1 // pred_region
      %s30 = ssub.s32 16, 16
      %31 = vsyncadd [#allocation6], %s30
      %s33 = sshll.u32 [#allocation5], 4
      %s34 = int_to_ptr.vmem [resolvable:$true] %s33
      %36 = dma.hbm_to_vmem [thread:$0]  %s2, 16, %s34, [#allocation6]
    $region13: #{tpu_custom_call.1} parent=1 // pred_fallthru
      _
    // Predicated region
    $region14: #{tpu_custom_call.1} parent=1 // pred_check
      _
    $region15: #{tpu_custom_call.1} parent=1 // pred_check_branch
      %38 = sbr.rel (0) target = $region17
    $region16: #{tpu_custom_call.1} parent=1 // pred_region
      _
    $region17: #{tpu_custom_call.1} parent=1 // pred_fallthru
      _
    // Predicated region
    $region18: #{tpu_custom_call.1} parent=1 // pred_check
      _
    $region19: #{tpu_custom_call.1} parent=1 // pred_check_branch
      %40 = sbr.rel (0) target = $region21
    $region20: #{tpu_custom_call.1} parent=1 // pred_region
      _
    $region21: #{tpu_custom_call.1} parent=1 // pred_fallthru
      _
    // Predicated region
    $region22: #{tpu_custom_call.1} parent=1 // pred_check
      _
    $region23: #{tpu_custom_call.1} parent=1 // pred_check_branch
      %42 = sbr.rel (0) target = $region25
    $region24: #{tpu_custom_call.1} parent=1 // pred_region
      %43 = dma.done [#allocation3], 512
    $region25: #{tpu_custom_call.1} parent=1 // pred_fallthru
      _
    // Predicated region
    $region26: #{tpu_custom_call.1} parent=1 // pred_check
      _
    $region27: #{tpu_custom_call.1} parent=1 // pred_check_branch
      %45 = sbr.rel (0) target = $region29
    $region28: #{tpu_custom_call.1} parent=1 // pred_region
      %46 = dma.done [#allocation6], 16
    $region29: #{tpu_custom_call.1} parent=1 // pred_fallthru
      _
    %v47 = vld [vmem:[%s0] sm:$0xff]
    %v48 = vld [vmem:[#allocation2] sm:$0xff]
    %v49 = vld [vmem:[#allocation2 + $0x8] sm:$0xff]
    %v50 = vld [vmem:[#allocation2 + $0x10] sm:$0xff]
    %v51 = vld [vmem:[#allocation2 + $0x18] sm:$0xff]
    %v52 = vld [vmem:[#allocation5] sm:$0x1]
    %v54 = vlaneseq
    %v55 = vshrl.u32 %v54, 7
    %v56 = vsub.s32 0, %v55
    %v57 = vrot.slane %v52, %v56
    %vm59 = vcmask 261120
    %v61 = vsel %vm59, %v47, 0
    %63 = vmatprep.subr.mxu0 0.0
    %64 = vmatpush1.msra.mxu0 %v48
    %65 = vmatprep.subr.mxu0 0.0
    %66 = vmatpush1.msra.mxu0 %v49
    %67 = vmatprep.subr.mxu0 0.0
    %68 = vmatpush1.msra.mxu0 %v50
    %69 = vmatprep.subr.mxu0 0.0
    %70 = vmatpush1.msra.mxu0 %v51
    %71 = vmatprep.subr.mxu0 0.0
    %72 = vmatpush1.msra.mxu0 0.0
    %73 = vmatprep.subr.mxu0 0.0
    %74 = vmatpush1.msra.mxu0 0.0
    %75 = vmatprep.subr.mxu0 0.0
    %76 = vmatpush1.msra.mxu0 0.0
    %77 = vmatprep.subr.mxu0 0.0
    %78 = vmatpush1.msra.mxu0 0.0
    %79 = vmatprep.subr.mxu0 0.0
    %80 = vmatpush1.msra.mxu0 0.0
    %81 = vmatprep.subr.mxu0 0.0
    %82 = vmatpush1.msra.mxu0 0.0
    %83 = vmatprep.subr.mxu0 0.0
    %84 = vmatpush1.msra.mxu0 0.0
    %85 = vmatprep.subr.mxu0 0.0
    %86 = vmatpush1.msra.mxu0 0.0
    %87 = vmatprep.subr.mxu0 0.0
    %88 = vmatpush1.msra.mxu0 0.0
    %89 = vmatprep.subr.mxu0 0.0
    %90 = vmatpush1.msra.mxu0 0.0
    %91 = vmatprep.subr.mxu0 0.0
    %92 = vmatpush1.msra.mxu0 0.0
    %93 = vmatprep.subr.mxu0 0.0
    %94 = vmatpush1.msra.mxu0 0.0
    %95 = vmatprep.subr.mxu0 0.0
    %96 = vmatpush1.msra.mxu0 0.0
    %97 = vmatprep.subr.mxu0 0.0
    %98 = vmatpush1.msra.mxu0 0.0
    %99 = vmatprep.subr.mxu0 0.0
    %100 = vmatpush1.msra.mxu0 0.0
    %101 = vmatprep.subr.mxu0 0.0
    %102 = vmatpush1.msra.mxu0 0.0
    %103 = vmatprep.subr.mxu0 0.0
    %104 = vmatpush1.msra.mxu0 0.0
    %105 = vmatprep.subr.mxu0 0.0
    %106 = vmatpush1.msra.mxu0 0.0
    %107 = vmatprep.subr.mxu0 0.0
    %108 = vmatpush1.msra.mxu0 0.0
    %109 = vmatprep.subr.mxu0 0.0
    %110 = vmatpush1.msra.mxu0 0.0
    %111 = vmatprep.subr.mxu0 0.0
    %112 = vmatpush1.msra.mxu0 0.0
    %113 = vmatprep.subr.mxu0 0.0
    %114 = vmatpush1.msra.mxu0 0.0
    %115 = vmatprep.subr.mxu0 0.0
    %116 = vmatpush1.msra.mxu0 0.0
    %117 = vmatprep.subr.mxu0 0.0
    %118 = vmatpush1.msra.mxu0 0.0
    %119 = vmatprep.subr.mxu0 0.0
    %120 = vmatpush1.msra.mxu0 0.0
    %121 = vmatprep.subr.mxu0 0.0
    %122 = vmatpush1.msra.mxu0 0.0
    %123 = vmatprep.subr.mxu0 0.0
    %124 = vmatpush1.msra.mxu0 0.0
    %125 = vmatprep.subr.mxu0 0.0
    %126 = vmatpush1.msra.mxu0 0.0
    %127 = vmatprep.mubr.f32.mxu0 0.0
    %128 = vmatmul.mubr.f32.gmra.mrb[0].mxu0 %v61
    %v129 = vpop.f32.mrb[0].mxu0
    %v130 = vadd.f32 %v57, %v129
    %v131 = vpop.f32.mrb[0].mxu0
    %132 = vdwg.mxu0
    %v133 = vmax.f32 %v130, 0.0
    %v134 = vld [vmem:[%s3] sm:$0xff]
    %v135 = vld [vmem:[%s4] sm:$0xff]
    %137 = vset.pattern.permute.xlu0 0
    %138 = vperm.xlu0 %137, %v135
    %v139 = vpop.permute.xlu0 %138
    %141 = vmatprep.subr.mxu0 0.0
    %142 = vmatpush1.xpose.msra.mxu0 %v133
    %143 = vmatprep.subr.mxu0 0.0
    %144 = vmatpush1.xpose.msra.mxu0 0.0
    %145 = vmatprep.subr.mxu0 0.0
    %146 = vmatpush1.xpose.msra.mxu0 0.0
    %147 = vmatprep.subr.mxu0 0.0
    %148 = vmatpush1.xpose.msra.mxu0 0.0
    %149 = vmatprep.subr.mxu0 0.0
    %150 = vmatpush1.xpose.msra.mxu0 0.0
    %151 = vmatprep.subr.mxu0 0.0
    %152 = vmatpush1.xpose.msra.mxu0 0.0
    %153 = vmatprep.subr.mxu0 0.0
    %154 = vmatpush1.xpose.msra.mxu0 0.0
    %155 = vmatprep.subr.mxu0 0.0
    %156 = vmatpush1.xpose.msra.mxu0 0.0
    %157 = vmatprep.subr.mxu0 0.0
    %158 = vmatpush1.xpose.msra.mxu0 0.0
    %159 = vmatprep.subr.mxu0 0.0
    %160 = vmatpush1.xpose.msra.mxu0 0.0
    %161 = vmatprep.subr.mxu0 0.0
    %162 = vmatpush1.xpose.msra.mxu0 0.0
    %163 = vmatprep.subr.mxu0 0.0
    %164 = vmatpush1.xpose.msra.mxu0 0.0
    %165 = vmatprep.subr.mxu0 0.0
    %166 = vmatpush1.xpose.msra.mxu0 0.0
    %167 = vmatprep.subr.mxu0 0.0
    %168 = vmatpush1.xpose.msra.mxu0 0.0
    %169 = vmatprep.subr.mxu0 0.0
    %170 = vmatpush1.xpose.msra.mxu0 0.0
    %171 = vmatprep.subr.mxu0 0.0
    %172 = vmatpush1.xpose.msra.mxu0 0.0
    %173 = vmatprep.subr.mxu0 0.0
    %174 = vmatpush1.xpose.msra.mxu0 0.0
    %175 = vmatprep.subr.mxu0 0.0
    %176 = vmatpush1.xpose.msra.mxu0 0.0
    %177 = vmatprep.subr.mxu0 0.0
    %178 = vmatpush1.xpose.msra.mxu0 0.0
    %179 = vmatprep.subr.mxu0 0.0
    %180 = vmatpush1.xpose.msra.mxu0 0.0
    %181 = vmatprep.subr.mxu0 0.0
    %182 = vmatpush1.xpose.msra.mxu0 0.0
    %183 = vmatprep.subr.mxu0 0.0
    %184 = vmatpush1.xpose.msra.mxu0 0.0
    %185 = vmatprep.subr.mxu0 0.0
    %186 = vmatpush1.xpose.msra.mxu0 0.0
    %187 = vmatprep.subr.mxu0 0.0
    %188 = vmatpush1.xpose.msra.mxu0 0.0
    %189 = vmatprep.subr.mxu0 0.0
    %190 = vmatpush1.xpose.msra.mxu0 0.0
    %191 = vmatprep.subr.mxu0 0.0
    %192 = vmatpush1.xpose.msra.mxu0 0.0
    %193 = vmatprep.subr.mxu0 0.0
    %194 = vmatpush1.xpose.msra.mxu0 0.0
    %195 = vmatprep.subr.mxu0 0.0
    %196 = vmatpush1.xpose.msra.mxu0 0.0
    %197 = vmatprep.subr.mxu0 0.0
    %198 = vmatpush1.xpose.msra.mxu0 0.0
    %199 = vmatprep.subr.mxu0 0.0
    %200 = vmatpush1.xpose.msra.mxu0 0.0
    %201 = vmatprep.subr.mxu0 0.0
    %202 = vmatpush1.xpose.msra.mxu0 0.0
    %203 = vmatprep.subr.mxu0 0.0
    %204 = vmatpush1.xpose.msra.mxu0 0.0
    %205 = vmatprep.mubr.f32.mxu0 0.0
    %206 = vmatmul.mubr.f32.gmra.mrb[0].mxu0 %v134
    %v207 = vpop.f32.mrb[0].mxu0
    %v208 = vadd.f32 %v139, %v207
    %v209 = vpop.f32.mrb[0].mxu0
    %210 = vdwg.mxu0
    %vm211 = vcmask 64512
    %212 = vst.msk [vmem:[#allocation7] sm:$0xff] %vm211, %v208
    // Predicated region
    $region30: #{tpu_custom_call.1} parent=1 // pred_check
      _
    $region31: #{tpu_custom_call.1} parent=1 // pred_check_branch
      %214 = sbr.rel (0) target = $region33
    $region32: #{tpu_custom_call.1} parent=1 // pred_region
      %s216 = ssub.s32 128, 128
      %217 = vsyncadd [#allocation4], %s216
      %s219 = sshll.u32 [#allocation7], 4
      %s220 = int_to_ptr.vmem [resolvable:$true] %s219
      %222 = dma.vmem_to_hbm [thread:$0]  %s220, 128, %s5, [#allocation4]
    $region33: #{tpu_custom_call.1} parent=1 // pred_fallthru
      _
    // Predicated region
    $region34: #{tpu_custom_call.1} parent=1 // pred_check
      _
    $region35: #{tpu_custom_call.1} parent=1 // pred_check_branch
      %224 = sbr.rel (0) target = $region37
    $region36: #{tpu_custom_call.1} parent=1 // pred_region
      %225 = dma.done [#allocation4], 128
    $region37: #{tpu_custom_call.1} parent=1 // pred_fallthru
      _
    %226 = vsyncpa [#allocation3], 1
    %227 = vsyncpa [#allocation6], 1
    %228 = vsyncpa [#allocation4], 1

</llo_original>
